<compile_context>
chip_gen: v6e
topology: v6e:2x2x1
jax: 0.10.0
libtpu: 0.0.40
codegen_flags: <defaults>
</compile_context>

<pallas_src>
import jax
import jax.numpy as jnp
from jax.experimental import pallas as pl
from jax.experimental.pallas import tpu as pltpu


def _round_up(x, m):
    return (x + m - 1) // m * m


def _vmem_budget_bytes():
    # ~85% of per-core VMEM: leaves headroom for Mosaic internal scratch.
    # v7x: ~54 MiB of 64 MiB;  v5e/v6e: ~108 MiB of 128 MiB.
    try:
        cap = int(pltpu.get_tpu_info().vmem_capacity_bytes)
    except Exception:
        cap = 64 * 1024 * 1024          # conservative fallback (v7x per-TC size)
    return int(cap * 0.85)


# ----------------------------------------------------------------------------
# Kernels
# ----------------------------------------------------------------------------

def _ffn_resident_kernel(x_ref, w1_ref, b1_ref, w2_ref, b2_ref, o_ref):
    # W1/W2/b1/b2 have constant block indices -> VMEM-resident, DMA'd once.
    # Single reduction step => no accumulator scratch, no pl.when phases.
    h = jnp.dot(x_ref[...], w1_ref[...], preferred_element_type=jnp.float32)
    h = jnp.maximum(h + b1_ref[...], 0.0)              # bias + ReLU in f32
    # dropout (eval mode) == identity
    o = jnp.dot(h.astype(w2_ref.dtype), w2_ref[...],
                preferred_element_type=jnp.float32)
    o_ref[...] = (o + b2_ref[...]).astype(o_ref.dtype)


def _ffn_streamed_kernel(x_ref, w1_ref, b1_ref, w2_ref, b2_ref, o_ref, acc_ref):
    # Reduction over d_ff slabs with an f32 VMEM accumulator (pattern P3).
    f = pl.program_id(1)

    @pl.when(f == 0)
    def _():
        acc_ref[...] = jnp.zeros_like(acc_ref)

    h = jnp.dot(x_ref[...], w1_ref[...], preferred_element_type=jnp.float32)
    h = jnp.maximum(h + b1_ref[...], 0.0)              # bias + ReLU in f32
    # dropout (eval mode) == identity
    acc_ref[...] += jnp.dot(h.astype(w2_ref.dtype), w2_ref[...],
                            preferred_element_type=jnp.float32)

    @pl.when(f == pl.num_programs(1) - 1)
    def _():
        o_ref[...] = (acc_ref[...] + b2_ref[...]).astype(o_ref.dtype)


# ----------------------------------------------------------------------------
# Wrapper
# ----------------------------------------------------------------------------

def make_feed_forward(w1, b1, w2, b2, *, tm=None, tf=512,
                      compute_dtype=jnp.bfloat16, force_streamed=False):
    """Build an `apply(x)` closure for the FFN.

    Weight casting / padding happens ONCE here (hoisted out of the per-call
    hot path).  Mode (weight-resident vs streamed d_ff slabs) and the row tile
    are chosen from the actual per-core VMEM budget.
    """
    d_model, d_ff = w1.shape
    cdt = jnp.dtype(compute_dtype)
    isz = cdt.itemsize
    # bf16 packs two rows per sublane -> align row tiles to 16 (32 for int8).
    row_align = 8 if isz >= 4 else (16 if isz == 2 else 32)
    budget = _vmem_budget_bytes()

    w_bytes = (w1.size + w2.size) * isz + (b1.size + b2.size) * 4

    # ---- resident-mode feasibility (conservative: count 2 pipeline buffers
    #      even though the constant block index means one DMA, plus the
    #      (tm, d_ff) intermediate h in f32 + its compute-dtype cast). --------
    def _resident_fit(tm_e):
        return (2 * w_bytes
                + 2 * tm_e * d_model * (isz + 4)       # x tile + out tile (f32)
                + tm_e * d_ff * (4 + isz))             # h (f32) + cast copy

    tm_res = _round_up(tm if tm is not None else 512, row_align)
    while tm_res > row_align and _resident_fit(tm_res) > budget:
        tm_res = _round_up(tm_res // 2, row_align)
    resident = (not force_streamed) and _resident_fit(tm_res) <= budget

    if resident:
        tf_eff = d_ff
        d_ff_p = d_ff
        tm_plan = tm_res
        w1_p = w1.astype(cdt)
        w2_p = w2.astype(cdt)
        b1_p = b1.reshape(1, d_ff).astype(jnp.float32)
        b2_p = b2.reshape(1, d_model).astype(jnp.float32)
    else:
        # Streamed slabs: keep tf >= 512 by default so each strided W1 chunk
        # is >= 1 KB; zero-pad d_ff (zero slabs contribute nothing post-ReLU).
        tf_eff = max(128, min(_round_up(tf, 128), _round_up(d_ff, 128)))
        d_ff_p = _round_up(d_ff, tf_eff)

        def _streamed_fit(tm_e):
            return (2 * (tm_e * d_model * isz          # x tile
                         + d_model * tf_eff * isz      # W1 slab
                         + tf_eff * 4                  # b1 slab
                         + tf_eff * d_model * isz      # W2 slab
                         + d_model * 4                 # b2
                         + tm_e * d_model * 4)         # out tile (assume f32)
                    + tm_e * d_model * 4               # f32 accumulator
                    + tm_e * tf_eff * (4 + isz))       # h (f32) + cast copy

        # Large default row tile so the streamed pipeline is MXU-bound
        # (v6e needs ~768+ rows per weight re-read); shrink to fit VMEM.
        tm_plan = _round_up(tm if tm is not None else 1024, row_align)
        while tm_plan > row_align and _streamed_fit(tm_plan) > budget:
            tm_plan = _round_up(tm_plan // 2, row_align)

        if d_ff_p != d_ff:
            w1_p = jnp.pad(w1, ((0, 0), (0, d_ff_p - d_ff))).astype(cdt)
            b1_p = jnp.pad(b1, (0, d_ff_p - d_ff)).reshape(1, d_ff_p).astype(jnp.float32)
            w2_p = jnp.pad(w2, ((0, d_ff_p - d_ff), (0, 0))).astype(cdt)
        else:
            w1_p = w1.astype(cdt)
            b1_p = b1.reshape(1, d_ff_p).astype(jnp.float32)
            w2_p = w2.astype(cdt)
        b2_p = b2.reshape(1, d_model).astype(jnp.float32)

    def apply(x):
        B, S, dm = x.shape
        assert dm == d_model
        out_dtype = x.dtype
        osz = jnp.dtype(out_dtype).itemsize
        M = B * S

        tm_eff = min(tm_plan, _round_up(M, row_align))
        Mp = _round_up(M, tm_eff)
        n_row_tiles = Mp // tm_eff

        x2d = x.reshape(M, d_model)
        if Mp != M:
            x2d = jnp.pad(x2d, ((0, Mp - M), (0, 0)))
        x2d = x2d.astype(cdt)

        if resident:
            cost = pl.CostEstimate(
                flops=int(4 * Mp * d_model * d_ff),
                transcendentals=0,
                bytes_accessed=int(x2d.size * isz + w_bytes
                                   + Mp * d_model * osz),
            )
            out2d = pl.pallas_call(
                _ffn_resident_kernel,
                out_shape=jax.ShapeDtypeStruct((Mp, d_model), out_dtype),
                grid_spec=pltpu.PrefetchScalarGridSpec(
                    num_scalar_prefetch=0,
                    grid=(n_row_tiles,),
                    in_specs=[
                        pl.BlockSpec((tm_eff, d_model), lambda i: (i, 0)),  # x rows
                        pl.BlockSpec((d_model, d_ff), lambda i: (0, 0)),    # W1 resident
                        pl.BlockSpec((1, d_ff), lambda i: (0, 0)),          # b1 resident
                        pl.BlockSpec((d_ff, d_model), lambda i: (0, 0)),    # W2 resident
                        pl.BlockSpec((1, d_model), lambda i: (0, 0)),       # b2 resident
                    ],
                    out_specs=pl.BlockSpec((tm_eff, d_model), lambda i: (i, 0)),
                ),
                compiler_params=pltpu.CompilerParams(
                    dimension_semantics=("parallel",),
                    vmem_limit_bytes=budget,
                ),
                cost_estimate=cost,
            )(x2d, w1_p, b1_p, w2_p, b2_p)
        else:
            grid = (n_row_tiles, d_ff_p // tf_eff)
            # streamed mode re-reads the weight set once per row tile
            cost = pl.CostEstimate(
                flops=int(4 * Mp * d_model * d_ff_p),
                transcendentals=0,
                bytes_accessed=int(x2d.size * isz
                                   + n_row_tiles * ((w1_p.size + w2_p.size) * isz
                                                    + (b1_p.size + b2_p.size) * 4)
                                   + Mp * d_model * osz),
            )
            out2d = pl.pallas_call(
                _ffn_streamed_kernel,
                out_shape=jax.ShapeDtypeStruct((Mp, d_model), out_dtype),
                grid_spec=pltpu.PrefetchScalarGridSpec(
                    num_scalar_prefetch=0,
                    grid=grid,
                    in_specs=[
                        pl.BlockSpec((tm_eff, d_model), lambda i, f: (i, 0)),  # x rows
                        pl.BlockSpec((d_model, tf_eff), lambda i, f: (0, f)),  # W1 slab
                        pl.BlockSpec((1, tf_eff), lambda i, f: (0, f)),        # b1 slab
                        pl.BlockSpec((tf_eff, d_model), lambda i, f: (f, 0)),  # W2 slab
                        pl.BlockSpec((1, d_model), lambda i, f: (0, 0)),       # b2
                    ],
                    out_specs=pl.BlockSpec((tm_eff, d_model), lambda i, f: (i, 0)),
                    scratch_shapes=[pltpu.VMEM((tm_eff, d_model), jnp.float32)],
                ),
                compiler_params=pltpu.CompilerParams(
                    dimension_semantics=("parallel", "arbitrary"),
                    vmem_limit_bytes=budget,
                ),
                cost_estimate=cost,
            )(x2d, w1_p, b1_p, w2_p, b2_p)

        return out2d[:M].reshape(B, S, d_model)

    return apply


def feed_forward(x, w1, b1, w2, b2, **kwargs):
    """One-off convenience wrapper.  For repeated calls build the closure once
    with make_feed_forward so weight cast/pad is not repeated per call."""
    return make_feed_forward(w1, b1, w2, b2, **kwargs)(x)


# ----------------------------------------------------------------------------
# Tests
# ----------------------------------------------------------------------------

if __name__ == "__main__":
    def ref_ffn(x, w1, b1, w2, b2):
        return jnp.maximum(x @ w1 + b1, 0.0) @ w2 + b2

    key = jax.random.PRNGKey(0)

    # Small shapes consistent with the module's encoder FFN (d_ff = 2*d_model).
    B, S, d_model, d_ff = 2, 8, 128, 256
    kx, kw1, kb1, kw2, kb2, k2 = jax.random.split(key, 6)
    x = jax.random.normal(kx, (B, S, d_model), dtype=jnp.float32)
    lim1 = 1.0 / (d_model ** 0.5)
    lim2 = 1.0 / (d_ff ** 0.5)
    w1 = jax.random.uniform(kw1, (d_model, d_ff), jnp.float32, -lim1, lim1)
    b1 = jax.random.uniform(kb1, (d_ff,), jnp.float32, -lim1, lim1)
    w2 = jax.random.uniform(kw2, (d_ff, d_model), jnp.float32, -lim2, lim2)
    b2 = jax.random.uniform(kb2, (d_model,), jnp.float32, -lim2, lim2)
    ref = ref_ffn(x, w1, b1, w2, b2)

    # Test 1: resident-weight mode, default bf16 MXU compute (f32 accum/bias).
    ffn_bf16 = make_feed_forward(w1, b1, w2, b2)          # weights prepared once
    out = ffn_bf16(x)
    jax.block_until_ready(out)
    assert out.shape == (B, S, d_model)
    assert jnp.allclose(out, ref, atol=5e-2, rtol=5e-2)   # bf16 tolerance

    # Test 2: resident-weight mode, f32 compute -> tight tolerance.
    ffn_f32 = make_feed_forward(w1, b1, w2, b2, compute_dtype=jnp.float32)
    out_f32 = ffn_f32(x)
    jax.block_until_ready(out_f32)
    assert jnp.allclose(out_f32, ref, atol=1e-4, rtol=1e-4)

    # Test 3: streamed fallback (multi-step d_ff reduction + accumulator,
    # non-divisible row count, row padding), f32 compute for a tight check.
    B2, S2, d_model2, d_ff2 = 2, 5, 128, 384
    kx2, kw1b, kb1b, kw2b, kb2b = jax.random.split(k2, 5)
    x_b = jax.random.normal(kx2, (B2, S2, d_model2), dtype=jnp.float32)
    l1 = 1.0 / (d_model2 ** 0.5)
    l2 = 1.0 / (d_ff2 ** 0.5)
    w1b = jax.random.uniform(kw1b, (d_model2, d_ff2), jnp.float32, -l1, l1)
    b1b = jax.random.uniform(kb1b, (d_ff2,), jnp.float32, -l1, l1)
    w2b = jax.random.uniform(kw2b, (d_ff2, d_model2), jnp.float32, -l2, l2)
    b2b = jax.random.uniform(kb2b, (d_model2,), jnp.float32, -l2, l2)
    out_b = feed_forward(x_b, w1b, b1b, w2b, b2b, tf=128,
                         compute_dtype=jnp.float32, force_streamed=True)
    jax.block_until_ready(out_b)
    assert out_b.shape == (B2, S2, d_model2)
    assert jnp.allclose(out_b, ref_ffn(x_b, w1b, b1b, w2b, b2b),
                        atol=1e-4, rtol=1e-4)

    print("KERNEL_OK")
</pallas_src>

<mosaic_0001>
module attributes {stable_mosaic.version = 11 : i64} {
  func.func @_ffn_resident_kernel(%arg0: i32, %arg1: memref<16x128xbf16, #tpu.memory_space<vmem>>, %arg2: memref<128x256xbf16, #tpu.memory_space<vmem>>, %arg3: memref<1x256xf32, #tpu.memory_space<vmem>>, %arg4: memref<256x128xbf16, #tpu.memory_space<vmem>>, %arg5: memref<1x128xf32, #tpu.memory_space<vmem>>, %arg6: memref<16x128xf32, #tpu.memory_space<vmem>>) attributes {dimension_semantics = [#tpu.dimension_semantics<parallel>], iteration_bounds = array<i64: 1>, scalar_prefetch = 0 : i64, scratch_operands = 0 : i64, tpu.core_type = #tpu.core_type<tc>, window_params = [{transform_indices = @transform_0, window_bounds = array<i64: 16, 128>}, {pipeline_mode = #tpu.pipeline_mode<synchronous>, transform_indices = @transform_1, window_bounds = array<i64: 128, 256>}, {pipeline_mode = #tpu.pipeline_mode<synchronous>, transform_indices = @transform_2, window_bounds = array<i64: 1, 256>}, {pipeline_mode = #tpu.pipeline_mode<synchronous>, transform_indices = @transform_3, window_bounds = array<i64: 256, 128>}, {pipeline_mode = #tpu.pipeline_mode<synchronous>, transform_indices = @transform_4, window_bounds = array<i64: 1, 128>}, {transform_indices = @transform_5, window_bounds = array<i64: 16, 128>}]} {
    %c0 = arith.constant 0 : index
    %c0_0 = arith.constant 0 : index
    %0 = vector.load %arg1[%c0, %c0_0] : memref<16x128xbf16, #tpu.memory_space<vmem>>, vector<16x128xbf16>
    %c0_1 = arith.constant 0 : index
    %c0_2 = arith.constant 0 : index
    %1 = vector.load %arg2[%c0_1, %c0_2] : memref<128x256xbf16, #tpu.memory_space<vmem>>, vector<128x256xbf16>
    %cst = arith.constant dense<0.000000e+00> : vector<16x256xf32>
    %2 = tpu.matmul %0, %1, %cst {dimension_numbers = #tpu.dot_dimension_numbers<[1], [0], [0], [1], [0, 0, 1, 1], [], []>} : vector<16x128xbf16>, vector<128x256xbf16>, vector<16x256xf32> -> vector<16x256xf32>
    %c0_3 = arith.constant 0 : index
    %c0_4 = arith.constant 0 : index
    %3 = vector.load %arg3[%c0_3, %c0_4] : memref<1x256xf32, #tpu.memory_space<vmem>>, vector<1x256xf32>
    %4 = vector.broadcast %3 : vector<1x256xf32> to vector<16x256xf32>
    %5 = arith.addf %2, %4 : vector<16x256xf32>
    %cst_5 = arith.constant 0.000000e+00 : f32
    %6 = vector.broadcast %cst_5 : f32 to vector<16x256xf32>
    %7 = arith.maximumf %5, %6 : vector<16x256xf32>
    %8 = arith.truncf %7 : vector<16x256xf32> to vector<16x256xbf16>
    %c0_6 = arith.constant 0 : index
    %c0_7 = arith.constant 0 : index
    %9 = vector.load %arg4[%c0_6, %c0_7] : memref<256x128xbf16, #tpu.memory_space<vmem>>, vector<256x128xbf16>
    %cst_8 = arith.constant dense<0.000000e+00> : vector<16x128xf32>
    %10 = tpu.matmul %8, %9, %cst_8 {dimension_numbers = #tpu.dot_dimension_numbers<[1], [0], [0], [1], [0, 0, 1, 1], [], []>} : vector<16x256xbf16>, vector<256x128xbf16>, vector<16x128xf32> -> vector<16x128xf32>
    %c0_9 = arith.constant 0 : index
    %c0_10 = arith.constant 0 : index
    %11 = vector.load %arg5[%c0_9, %c0_10] : memref<1x128xf32, #tpu.memory_space<vmem>>, vector<1x128xf32>
    %12 = vector.broadcast %11 : vector<1x128xf32> to vector<16x128xf32>
    %13 = arith.addf %10, %12 : vector<16x128xf32>
    %c0_11 = arith.constant 0 : index
    %c0_12 = arith.constant 0 : index
    %14 = vector.load %arg6[%c0_11, %c0_12] : memref<16x128xf32, #tpu.memory_space<vmem>>, vector<16x128xf32>
    tpu.vector_store %arg6[%c0_11, %c0_12], %13 {strides = array<i32>} : memref<16x128xf32, #tpu.memory_space<vmem>>, vector<16x128xf32>,
    return
  }
  func.func @transform_0(%arg0: i32) -> (i32, i32) {
    %c0_i32 = arith.constant 0 : i32
    %c0_i32_0 = arith.constant 0 : i32
    return %arg0, %c0_i32 : i32, i32
  }
  func.func @transform_1(%arg0: i32) -> (i32, i32) {
    %c0_i32 = arith.constant 0 : i32
    %c0_i32_0 = arith.constant 0 : i32
    %c0_i32_1 = arith.constant 0 : i32
    return %c0_i32, %c0_i32_0 : i32, i32
  }
  func.func @transform_2(%arg0: i32) -> (i32, i32) {
    %c0_i32 = arith.constant 0 : i32
    %c0_i32_0 = arith.constant 0 : i32
    %c0_i32_1 = arith.constant 0 : i32
    return %c0_i32, %c0_i32_0 : i32, i32
  }
  func.func @transform_3(%arg0: i32) -> (i32, i32) {
    %c0_i32 = arith.constant 0 : i32
    %c0_i32_0 = arith.constant 0 : i32
    %c0_i32_1 = arith.constant 0 : i32
    return %c0_i32, %c0_i32_0 : i32, i32
  }
  func.func @transform_4(%arg0: i32) -> (i32, i32) {
    %c0_i32 = arith.constant 0 : i32
    %c0_i32_0 = arith.constant 0 : i32
    %c0_i32_1 = arith.constant 0 : i32
    return %c0_i32, %c0_i32_0 : i32, i32
  }
  func.func @transform_5(%arg0: i32) -> (i32, i32) {
    %c0_i32 = arith.constant 0 : i32
    %c0_i32_0 = arith.constant 0 : i32
    return %arg0, %c0_i32 : i32, i32
  }
}

</mosaic_0001>

<llo_original>
// kernel: tpu_custom_call.1
$region0: #{tpu_custom_call.1}
  #allocation0 [shape = 'u32[]', space=smem, size = 0x4, offset = 0x4, fixed_abs, tag = 'smem constant byte address 0x4 - core index']
  #allocation1 [shape = 'u32[144,128]{1,0:T(1,128)}', space=vmem, size = 0x12000, scoped, tag = 'internal scratch']
  %s0 = inlined_call_operand.hbm [shape: bf16[16,128], index: 0, kind: input, shape index: {}]
  %s1 = inlined_call_operand.hbm [shape: bf16[128,256], index: 1, kind: input, shape index: {}]
  %s2 = inlined_call_operand.vmem [shape: f32[1,256], index: 2, kind: input, shape index: {}]
  %s3 = inlined_call_operand.hbm [shape: bf16[256,128], index: 3, kind: input, shape index: {}]
  %s4 = inlined_call_operand.vmem [shape: f32[1,128], index: 4, kind: input, shape index: {}]
  %s5 = inlined_call_operand.hbm [shape: f32[16,128], index: 5, kind: output, shape index: {}]
  %s6 = sld [smem:[#allocation0]]
  $region42: #{tpu_custom_call.1} parent=0
    _
  %s8 = ssub.s32 1, %s6
  %s9 = scalar_select 0, %s8, %s6
  $region1: #{tpu_custom_call.1} parent=0
    #allocation2 [shape = 'u8[4096]{0}', space=vmem, size = 0x1000, scoped, tag = 'input window, operand 0, single buffered']
    #allocation3 [shape = 's32[1]{0}', space=sflag, size = 0x4, scoped, tag = 'scoped memory for tpu_custom_call.1']
    #allocation4 [shape = 's32[1]{0}', space=sflag, size = 0x4, scoped, tag = 'scoped memory for tpu_custom_call.1']
    #allocation5 [shape = 'u8[65536]{0}', space=vmem, size = 0x10000, scoped, tag = 'input window, operand 1, single buffered']
    #allocation6 [shape = 's32[1]{0}', space=sflag, size = 0x4, scoped, tag = 'scoped memory for tpu_custom_call.1']
    #allocation7 [shape = 'u8[65536]{0}', space=vmem, size = 0x10000, scoped, tag = 'input window, operand 3, single buffered']
    #allocation8 [shape = 'u8[8192]{0}', space=vmem, size = 0x2000, scoped, tag = 'output window, operand 0, single buffered']
    %10 = vsyncpa [#allocation3], 0
    %11 = vsyncpa [#allocation6], 0
    %12 = vsyncpa [#allocation4], 0
    // Predicated region
    $region2: #{tpu_custom_call.1} parent=1 // pred_check
      _
    $region3: #{tpu_custom_call.1} parent=1 // pred_check_branch
      %14 = sbr.rel (0) target = $region5
    $region4: #{tpu_custom_call.1} parent=1 // pred_region
      %s16 = ssub.s32 128, 128
      %17 = vsyncadd [#allocation3], %s16
      %s18 = sshll.u32 [#allocation2], 4
      %s19 = int_to_ptr.vmem [resolvable:$true] %s18
      %24 = dma.hbm_to_vmem [thread:$0]  %s0, 128, %s19, [#allocation3], 64, 64, 4
    $region5: #{tpu_custom_call.1} parent=1 // pred_fallthru
      _
    // Predicated region
    $region6: #{tpu_custom_call.1} parent=1 // pred_check
      _
    $region7: #{tpu_custom_call.1} parent=1 // pred_check_branch
      %26 = sbr.rel (0) target = $region9
    $region8: #{tpu_custom_call.1} parent=1 // pred_region
      %s28 = ssub.s32 2048, 2048
      %29 = vsyncadd [#allocation6], %s28
      %s30 = sshll.u32 [#allocation5], 4
      %s31 = int_to_ptr.vmem [resolvable:$true] %s30
      %36 = dma.hbm_to_vmem [thread:$0]  %s1, 2048, %s31, [#allocation6], 128, 128, 8
    $region9: #{tpu_custom_call.1} parent=1 // pred_fallthru
      _
    // Predicated region
    $region10: #{tpu_custom_call.1} parent=1 // pred_check
      _
    $region11: #{tpu_custom_call.1} parent=1 // pred_check_branch
      %38 = sbr.rel (0) target = $region13
    $region12: #{tpu_custom_call.1} parent=1 // pred_region
      _
    $region13: #{tpu_custom_call.1} parent=1 // pred_fallthru
      _
    // Predicated region
    $region14: #{tpu_custom_call.1} parent=1 // pred_check
      _
    $region15: #{tpu_custom_call.1} parent=1 // pred_check_branch
      %40 = sbr.rel (0) target = $region17
    $region16: #{tpu_custom_call.1} parent=1 // pred_region
      %s42 = ssub.s32 2048, 2048
      %43 = vsyncadd [#allocation6], %s42
      %s44 = sshll.u32 [#allocation7], 4
      %s45 = int_to_ptr.vmem [resolvable:$true] %s44
      %50 = dma.hbm_to_vmem [thread:$0]  %s3, 2048, %s45, [#allocation6], 64, 64, 4
    $region17: #{tpu_custom_call.1} parent=1 // pred_fallthru
      _
    // Predicated region
    $region18: #{tpu_custom_call.1} parent=1 // pred_check
      _
    $region19: #{tpu_custom_call.1} parent=1 // pred_check_branch
      %52 = sbr.rel (0) target = $region21
    $region20: #{tpu_custom_call.1} parent=1 // pred_region
      _
    $region21: #{tpu_custom_call.1} parent=1 // pred_fallthru
      _
    // Predicated region
    $region22: #{tpu_custom_call.1} parent=1 // pred_check
      _
    $region23: #{tpu_custom_call.1} parent=1 // pred_check_branch
      %54 = sbr.rel (0) target = $region25
    $region24: #{tpu_custom_call.1} parent=1 // pred_region
      %55 = dma.done [#allocation3], 128
    $region25: #{tpu_custom_call.1} parent=1 // pred_fallthru
      _
    // Predicated region
    $region26: #{tpu_custom_call.1} parent=1 // pred_check
      _
    $region27: #{tpu_custom_call.1} parent=1 // pred_check_branch
      %57 = sbr.rel (0) target = $region29
    $region28: #{tpu_custom_call.1} parent=1 // pred_region
      %58 = dma.done [#allocation6], 2048
    $region29: #{tpu_custom_call.1} parent=1 // pred_fallthru
      _
    // Predicated region
    $region30: #{tpu_custom_call.1} parent=1 // pred_check
      _
    $region31: #{tpu_custom_call.1} parent=1 // pred_check_branch
      %60 = sbr.rel (0) target = $region33
    $region32: #{tpu_custom_call.1} parent=1 // pred_region
      %61 = dma.done [#allocation6], 2048
    $region33: #{tpu_custom_call.1} parent=1 // pred_fallthru
      _
    %v63 = vld [vmem:[#allocation2] sm:$0xf]
    %v64 = vld [vmem:[#allocation2 + $0x4] sm:$0xf]
    %v65 = vld [vmem:[#allocation5] sm:$0xff]
    %v66 = vld [vmem:[#allocation5 + $0x8] sm:$0xff]
    %v67 = vld [vmem:[#allocation5 + $0x10] sm:$0xff]
    %v68 = vld [vmem:[#allocation5 + $0x18] sm:$0xff]
    %v69 = vld [vmem:[#allocation5 + $0x20] sm:$0xff]
    %v70 = vld [vmem:[#allocation5 + $0x28] sm:$0xff]
    %v71 = vld [vmem:[#allocation5 + $0x30] sm:$0xff]
    %v72 = vld [vmem:[#allocation5 + $0x38] sm:$0xff]
    %v73 = vld [vmem:[#allocation5 + $0x40] sm:$0xff]
    %v74 = vld [vmem:[#allocation5 + $0x48] sm:$0xff]
    %v75 = vld [vmem:[#allocation5 + $0x50] sm:$0xff]
    %v76 = vld [vmem:[#allocation5 + $0x58] sm:$0xff]
    %v77 = vld [vmem:[#allocation5 + $0x60] sm:$0xff]
    %v78 = vld [vmem:[#allocation5 + $0x68] sm:$0xff]
    %v79 = vld [vmem:[#allocation5 + $0x70] sm:$0xff]
    %v80 = vld [vmem:[#allocation5 + $0x78] sm:$0xff]
    %v81 = vld [vmem:[%s2] sm:$0x3]
    %v83 = vlaneseq
    %v84 = vshrl.u32 %v83, 7
    %v85 = vsub.s32 0, %v84
    %v86 = vrot.slane %v81, %v85
    %v87 = vlaneseq
    %v88 = vshrl.u32 %v87, 7
    %v89 = vsub.s32 1, %v88
    %v90 = vrot.slane %v81, %v89
    %v95 = vunpack.c.l.b16 %v63
    %v96 = vunpack.c.l.b16 %v64
    %v97 = vpack.c.b16 %v96, %v95
    %v115 = vunpack.c.l.b16 %v65
    %v116 = vunpack.c.h.b16 %v65
    %v117 = vunpack.c.l.b16 %v66
    %v118 = vunpack.c.h.b16 %v66
    %v119 = vunpack.c.l.b16 %v67
    %v120 = vunpack.c.h.b16 %v67
    %v121 = vunpack.c.l.b16 %v68
    %v122 = vunpack.c.h.b16 %v68
    %v123 = vunpack.c.l.b16 %v69
    %v124 = vunpack.c.h.b16 %v69
    %v125 = vunpack.c.l.b16 %v70
    %v126 = vunpack.c.h.b16 %v70
    %v127 = vunpack.c.l.b16 %v71
    %v128 = vunpack.c.h.b16 %v71
    %v129 = vunpack.c.l.b16 %v72
    %v130 = vunpack.c.h.b16 %v72
    %v131 = vunpack.c.l.b16 %v73
    %v132 = vunpack.c.h.b16 %v73
    %v133 = vunpack.c.l.b16 %v74
    %v134 = vunpack.c.h.b16 %v74
    %v135 = vunpack.c.l.b16 %v75
    %v136 = vunpack.c.h.b16 %v75
    %v137 = vunpack.c.l.b16 %v76
    %v138 = vunpack.c.h.b16 %v76
    %v139 = vunpack.c.l.b16 %v77
    %v140 = vunpack.c.h.b16 %v77
    %v141 = vunpack.c.l.b16 %v78
    %v142 = vunpack.c.h.b16 %v78
    %v143 = vunpack.c.l.b16 %v79
    %v144 = vunpack.c.h.b16 %v79
    %v145 = vunpack.c.l.b16 %v80
    %v146 = vunpack.c.h.b16 %v80
    %v147 = vpack.c.b16 %v117, %v115
    %v148 = vpack.c.b16 %v118, %v116
    %v149 = vpack.c.b16 %v121, %v119
    %v150 = vpack.c.b16 %v122, %v120
    %v151 = vpack.c.b16 %v125, %v123
    %v152 = vpack.c.b16 %v126, %v124
    %v153 = vpack.c.b16 %v129, %v127
    %v154 = vpack.c.b16 %v130, %v128
    %v155 = vpack.c.b16 %v133, %v131
    %v156 = vpack.c.b16 %v134, %v132
    %v157 = vpack.c.b16 %v137, %v135
    %v158 = vpack.c.b16 %v138, %v136
    %v159 = vpack.c.b16 %v141, %v139
    %v160 = vpack.c.b16 %v142, %v140
    %v161 = vpack.c.b16 %v145, %v143
    %v162 = vpack.c.b16 %v146, %v144
    %179 = vmatprep.subr.bf16.mxu0 %v162
    %180 = vmatpush1.bf16.msra.mxu0 %v161
    %181 = vmatprep.subr.bf16.mxu0 %v160
    %182 = vmatpush1.bf16.msra.mxu0 %v159
    %183 = vmatprep.subr.bf16.mxu0 %v158
    %184 = vmatpush1.bf16.msra.mxu0 %v157
    %185 = vmatprep.subr.bf16.mxu0 %v156
    %186 = vmatpush1.bf16.msra.mxu0 %v155
    %187 = vmatprep.subr.bf16.mxu0 %v154
    %188 = vmatpush1.bf16.msra.mxu0 %v153
    %189 = vmatprep.subr.bf16.mxu0 %v152
    %190 = vmatpush1.bf16.msra.mxu0 %v151
    %191 = vmatprep.subr.bf16.mxu0 %v150
    %192 = vmatpush1.bf16.msra.mxu0 %v149
    %193 = vmatprep.subr.bf16.mxu0 %v148
    %194 = vmatpush1.bf16.msra.mxu0 %v147
    %195 = vmatprep.subr.bf16.mxu0 0
    %196 = vmatpush2.bf16.msra.mxu0 0
    %197 = vmatprep.subr.bf16.mxu0 0
    %198 = vmatpush2.bf16.msra.mxu0 0
    %199 = vmatprep.subr.bf16.mxu0 0
    %200 = vmatpush2.bf16.msra.mxu0 0
    %201 = vmatprep.subr.bf16.mxu0 0
    %202 = vmatpush2.bf16.msra.mxu0 0
    %203 = vmatprep.subr.bf16.mxu0 0
    %204 = vmatpush2.bf16.msra.mxu0 0
    %205 = vmatprep.subr.bf16.mxu0 0
    %206 = vmatpush2.bf16.msra.mxu0 0
    %207 = vmatprep.subr.bf16.mxu0 0
    %208 = vmatpush2.bf16.msra.mxu0 0
    %209 = vmatprep.subr.bf16.mxu0 0
    %210 = vmatpush2.bf16.msra.mxu0 0
    %211 = vmatprep.mubr.bf16.mxu0 0
    %212 = vmatmul.mubr.bf16.gmra.mxu0 %v97
    %v213 = vpop.f32.mrf.mxu0
    %v214 = vadd.f32 %v86, %v213
    %v215 = vpop.f32.mrf.mxu0
    %v216 = vadd.f32 %v90, %v215
    %v217 = vpop.f32.mrf.mxu0
    %v218 = vadd.f32 %v86, %v217
    %v219 = vpop.f32.mrf.mxu0
    %v220 = vadd.f32 %v90, %v219
    %221 = vdwg.mxu0
    %v222 = vmax.f32 %v214, 0.0
    %v223 = vmax.f32 %v216, 0.0
    %v224 = vmax.f32 %v218, 0.0
    %v225 = vmax.f32 %v220, 0.0
    %v226 = vpack.c.bf16 %v224, %v222
    %v227 = vpack.c.bf16 %v225, %v223
    %v228 = vld [vmem:[#allocation7] sm:$0xf]
    %v229 = vld [vmem:[#allocation7 + $0x4] sm:$0xf]
    %v230 = vld [vmem:[#allocation7 + $0x8] sm:$0xf]
    %v231 = vld [vmem:[#allocation7 + $0xc] sm:$0xf]
    %v232 = vld [vmem:[#allocation7 + $0x10] sm:$0xf]
    %v233 = vld [vmem:[#allocation7 + $0x14] sm:$0xf]
    %v234 = vld [vmem:[#allocation7 + $0x18] sm:$0xf]
    %v235 = vld [vmem:[#allocation7 + $0x1c] sm:$0xf]
    %v236 = vld [vmem:[#allocation7 + $0x20] sm:$0xf]
    %v237 = vld [vmem:[#allocation7 + $0x24] sm:$0xf]
    %v238 = vld [vmem:[#allocation7 + $0x28] sm:$0xf]
    %v239 = vld [vmem:[#allocation7 + $0x2c] sm:$0xf]
    %v240 = vld [vmem:[#allocation7 + $0x30] sm:$0xf]
    %v241 = vld [vmem:[#allocation7 + $0x34] sm:$0xf]
    %v242 = vld [vmem:[#allocation7 + $0x38] sm:$0xf]
    %v243 = vld [vmem:[#allocation7 + $0x3c] sm:$0xf]
    %v244 = vld [vmem:[#allocation7 + $0x40] sm:$0xf]
    %v245 = vld [vmem:[#allocation7 + $0x44] sm:$0xf]
    %v246 = vld [vmem:[#allocation7 + $0x48] sm:$0xf]
    %v247 = vld [vmem:[#allocation7 + $0x4c] sm:$0xf]
    %v248 = vld [vmem:[#allocation7 + $0x50] sm:$0xf]
    %v249 = vld [vmem:[#allocation7 + $0x54] sm:$0xf]
    %v250 = vld [vmem:[#allocation7 + $0x58] sm:$0xf]
    %v251 = vld [vmem:[#allocation7 + $0x5c] sm:$0xf]
    %v252 = vld [vmem:[#allocation7 + $0x60] sm:$0xf]
    %v253 = vld [vmem:[#allocation7 + $0x64] sm:$0xf]
    %v254 = vld [vmem:[#allocation7 + $0x68] sm:$0xf]
    %v255 = vld [vmem:[#allocation7 + $0x6c] sm:$0xf]
    %v256 = vld [vmem:[#allocation7 + $0x70] sm:$0xf]
    %v257 = vld [vmem:[#allocation7 + $0x74] sm:$0xf]
    %v258 = vld [vmem:[#allocation7 + $0x78] sm:$0xf]
    %v259 = vld [vmem:[#allocation7 + $0x7c] sm:$0xf]
    %v260 = vld [vmem:[%s4] sm:$0x1]
    %v262 = vlaneseq
    %v263 = vshrl.u32 %v262, 7
    %v264 = vsub.s32 0, %v263
    %v265 = vrot.slane %v260, %v264
    %v299 = vunpack.c.l.b16 %v228
    %v300 = vunpack.c.l.b16 %v229
    %v301 = vunpack.c.l.b16 %v230
    %v302 = vunpack.c.l.b16 %v231
    %v303 = vunpack.c.l.b16 %v232
    %v304 = vunpack.c.l.b16 %v233
    %v305 = vunpack.c.l.b16 %v234
    %v306 = vunpack.c.l.b16 %v235
    %v307 = vunpack.c.l.b16 %v236
    %v308 = vunpack.c.l.b16 %v237
    %v309 = vunpack.c.l.b16 %v238
    %v310 = vunpack.c.l.b16 %v239
    %v311 = vunpack.c.l.b16 %v240
    %v312 = vunpack.c.l.b16 %v241
    %v313 = vunpack.c.l.b16 %v242
    %v314 = vunpack.c.l.b16 %v243
    %v315 = vunpack.c.l.b16 %v244
    %v316 = vunpack.c.l.b16 %v245
    %v317 = vunpack.c.l.b16 %v246
    %v318 = vunpack.c.l.b16 %v247
    %v319 = vunpack.c.l.b16 %v248
    %v320 = vunpack.c.l.b16 %v249
    %v321 = vunpack.c.l.b16 %v250
    %v322 = vunpack.c.l.b16 %v251
    %v323 = vunpack.c.l.b16 %v252
    %v324 = vunpack.c.l.b16 %v253
    %v325 = vunpack.c.l.b16 %v254
    %v326 = vunpack.c.l.b16 %v255
    %v327 = vunpack.c.l.b16 %v256
    %v328 = vunpack.c.l.b16 %v257
    %v329 = vunpack.c.l.b16 %v258
    %v330 = vunpack.c.l.b16 %v259
    %v331 = vpack.c.b16 %v300, %v299
    %v332 = vpack.c.b16 %v302, %v301
    %v333 = vpack.c.b16 %v304, %v303
    %v334 = vpack.c.b16 %v306, %v305
    %v335 = vpack.c.b16 %v308, %v307
    %v336 = vpack.c.b16 %v310, %v309
    %v337 = vpack.c.b16 %v312, %v311
    %v338 = vpack.c.b16 %v314, %v313
    %v339 = vpack.c.b16 %v316, %v315
    %v340 = vpack.c.b16 %v318, %v317
    %v341 = vpack.c.b16 %v320, %v319
    %v342 = vpack.c.b16 %v322, %v321
    %v343 = vpack.c.b16 %v324, %v323
    %v344 = vpack.c.b16 %v326, %v325
    %v345 = vpack.c.b16 %v328, %v327
    %v346 = vpack.c.b16 %v330, %v329
    %363 = vmatprep.subr.bf16.mxu0 0
    %364 = vmatpush1.bf16.msra.mxu0 %v338
    %365 = vmatprep.subr.bf16.mxu0 0
    %366 = vmatpush1.bf16.msra.mxu0 %v337
    %367 = vmatprep.subr.bf16.mxu0 0
    %368 = vmatpush1.bf16.msra.mxu0 %v336
    %369 = vmatprep.subr.bf16.mxu0 0
    %370 = vmatpush1.bf16.msra.mxu0 %v335
    %371 = vmatprep.subr.bf16.mxu0 0
    %372 = vmatpush1.bf16.msra.mxu0 %v334
    %373 = vmatprep.subr.bf16.mxu0 0
    %374 = vmatpush1.bf16.msra.mxu0 %v333
    %375 = vmatprep.subr.bf16.mxu0 0
    %376 = vmatpush1.bf16.msra.mxu0 %v332
    %377 = vmatprep.subr.bf16.mxu0 0
    %378 = vmatpush1.bf16.msra.mxu0 %v331
    %379 = vmatprep.subr.bf16.mxu0 0
    %380 = vmatpush2.bf16.msra.mxu0 %v346
    %381 = vmatprep.subr.bf16.mxu0 0
    %382 = vmatpush2.bf16.msra.mxu0 %v345
    %383 = vmatprep.subr.bf16.mxu0 0
    %384 = vmatpush2.bf16.msra.mxu0 %v344
    %385 = vmatprep.subr.bf16.mxu0 0
    %386 = vmatpush2.bf16.msra.mxu0 %v343
    %387 = vmatprep.subr.bf16.mxu0 0
    %388 = vmatpush2.bf16.msra.mxu0 %v342
    %389 = vmatprep.subr.bf16.mxu0 0
    %390 = vmatpush2.bf16.msra.mxu0 %v341
    %391 = vmatprep.subr.bf16.mxu0 0
    %392 = vmatpush2.bf16.msra.mxu0 %v340
    %393 = vmatprep.subr.bf16.mxu0 0
    %394 = vmatpush2.bf16.msra.mxu0 %v339
    %395 = vmatprep.mubr.bf16.mxu0 %v227
    %396 = vmatmul.mubr.bf16.gmra.mxu0 %v226
    %v397 = vpop.f32.mrf.mxu0
    %v398 = vadd.f32 %v265, %v397
    %v399 = vpop.f32.mrf.mxu0
    %v400 = vpop.f32.mrf.mxu0
    %v401 = vadd.f32 %v265, %v400
    %v402 = vpop.f32.mrf.mxu0
    %403 = vdwg.mxu0
    %404 = vst [vmem:[#allocation8] sm:$0xff] %v398
    %405 = vst [vmem:[#allocation8 + $0x8] sm:$0xff] %v401
    // Predicated region
    $region34: #{tpu_custom_call.1} parent=1 // pred_check
      _
    $region35: #{tpu_custom_call.1} parent=1 // pred_check_branch
      %407 = sbr.rel (0) target = $region37
    $region36: #{tpu_custom_call.1} parent=1 // pred_region
      %s409 = ssub.s32 256, 256
      %410 = vsyncadd [#allocation4], %s409
      %s411 = sshll.u32 [#allocation8], 4
      %s412 = int_to_ptr.vmem [resolvable:$true] %s411
      %417 = dma.vmem_to_hbm [thread:$0]  %s412, 256, %s5, [#allocation4], 128, 128, 8
    $region37: #{tpu_custom_call.1} parent=1 // pred_fallthru
      _
    // Predicated region
    $region38: #{tpu_custom_call.1} parent=1 // pred_check
      _
    $region39: #{tpu_custom_call.1} parent=1 // pred_check_branch
      %419 = sbr.rel (0) target = $region41
    $region40: #{tpu_custom_call.1} parent=1 // pred_region
      %420 = dma.done [#allocation4], 256
    $region41: #{tpu_custom_call.1} parent=1 // pred_fallthru
      _
    %421 = vsyncpa [#allocation3], 1
    %422 = vsyncpa [#allocation6], 1
    %423 = vsyncpa [#allocation4], 1

</llo_original>
